<compile_context>
chip_gen: v5e
topology: v5e:2x2
jax: 0.10.0
libtpu: 0.0.40
codegen_flags: <defaults>
</compile_context>

<pallas_src>
import jax
import jax.numpy as jnp
from jax.experimental import pallas as pl
from jax.experimental.pallas import tpu as pltpu


def tense_head_kernel(cls_ref, w_ref, b_ref, out_ref):
    # cls_ref: (tb, H), w_ref: (H, C_pad), b_ref: (1, C_pad), out_ref: (tb, C_pad)
    x = jnp.maximum(cls_ref[...], 0.0)                  # relu1 (relu2 is a no-op on top)
    logits = jnp.dot(x, w_ref[...],                     # fc: (tb,H) @ (H,C_pad) on MXU
                     preferred_element_type=jnp.float32)
    out_ref[...] = logits + b_ref[...]                  # broadcast bias (1, C_pad)


def tense_classifier_head(last_hidden_state, fc_w, fc_b, *, tb=256):
    """last_hidden_state: (B,S,H) f32; fc_w: (C,H) (PyTorch Linear layout); fc_b: (C,)."""
    B, S, H = last_hidden_state.shape
    C = fc_b.shape[0]

    # --- wrapper-side layout plumbing (cheap, keeps kernel lane/sublane friendly) ---
    # Slice CLS row here so the kernel only ever sees (B, H) — S x bandwidth cut.
    cls = last_hidden_state[:, 0, :]                    # (B, H)

    # Lane-dense output: pad the class dim up to a multiple of 128.
    C_pad = ((C + 127) // 128) * 128
    w_t = jnp.zeros((H, C_pad), dtype=fc_w.dtype).at[:, :C].set(fc_w.T)   # (H, C_pad)
    b2 = jnp.zeros((1, C_pad), dtype=fc_b.dtype).at[:, :C].set(fc_b)      # (1, C_pad)

    # Batch tile: multiple of 8 sublanes, no bigger than the (padded) batch.
    tb = max(8, min(tb, ((B + 7) // 8) * 8))
    n_tiles = pl.cdiv(B, tb)
    B_pad = n_tiles * tb
    cls_p = jnp.zeros((B_pad, H), dtype=cls.dtype).at[:B, :].set(cls)

    out_padded = pl.pallas_call(
        tense_head_kernel,
        out_shape=jax.ShapeDtypeStruct((B_pad, C_pad), jnp.float32),
        grid=(n_tiles,),
        in_specs=[
            pl.BlockSpec((tb, H), lambda i: (i, 0)),      # streamed CLS tiles
            pl.BlockSpec((H, C_pad), lambda i: (0, 0)),   # resident weight
            pl.BlockSpec((1, C_pad), lambda i: (0, 0)),   # resident bias
        ],
        out_specs=pl.BlockSpec((tb, C_pad), lambda i: (i, 0)),
        compiler_params=pltpu.CompilerParams(
            dimension_semantics=("parallel",)),           # batch tiles independent
    )(cls_p, w_t, b2)

    return out_padded[:B, :C]


def synthetic_bert(input_ids, attention_mask, emb_table, mix_w):
    """Deterministic stand-in for bert(...).last_hidden_state. Plain-JAX glue."""
    h = emb_table[input_ids]                               # (B, S, H)
    h = jnp.tanh(jnp.einsum("bsh,hk->bsk", h, mix_w))      # cheap "encoder"
    h = h * attention_mask[..., None].astype(h.dtype)
    return h


def reference_forward(last_hidden_state, fc_w, fc_b):
    cls = last_hidden_state[:, 0, :]
    x = jnp.maximum(cls, 0.0)
    x = jnp.maximum(x, 0.0)
    return x @ fc_w.T + fc_b


if __name__ == "__main__":
    B, S, H, C, VOCAB = 2, 8, 32, 4, 64

    key = jax.random.PRNGKey(0)
    k_ids, k_emb, k_mix, k_w, k_b = jax.random.split(key, 5)

    input_ids = jax.random.randint(k_ids, (B, S), 0, VOCAB, dtype=jnp.int32)
    attention_mask = jnp.ones((B, S), dtype=jnp.int32)

    # deterministic synthetic parameters
    emb_table = 0.02 * jax.random.normal(k_emb, (VOCAB, H), dtype=jnp.float32)
    mix_w = 0.05 * jax.random.normal(k_mix, (H, H), dtype=jnp.float32)
    fc_w = 0.1 * jax.random.normal(k_w, (C, H), dtype=jnp.float32)   # nn.Linear weight (out,in)
    fc_b = 0.1 * jax.random.normal(k_b, (C,), dtype=jnp.float32)

    last_hidden_state = synthetic_bert(input_ids, attention_mask, emb_table, mix_w)

    logits = tense_classifier_head(last_hidden_state, fc_w, fc_b)
    logits = jax.block_until_ready(logits)

    ref = reference_forward(last_hidden_state, fc_w, fc_b)
    assert logits.shape == (B, C)
    assert jnp.allclose(logits, ref, atol=1e-5, rtol=1e-5)

    print("KERNEL_OK")
</pallas_src>

<mosaic_0001>
module attributes {stable_mosaic.version = 11 : i64} {
  func.func @tense_head_kernel(%arg0: i32, %arg1: memref<8x32xf32, #tpu.memory_space<vmem>>, %arg2: memref<32x128xf32, #tpu.memory_space<vmem>>, %arg3: memref<1x128xf32, #tpu.memory_space<vmem>>, %arg4: memref<8x128xf32, #tpu.memory_space<vmem>>) attributes {dimension_semantics = [#tpu.dimension_semantics<parallel>], iteration_bounds = array<i64: 1>, scalar_prefetch = 0 : i64, scratch_operands = 0 : i64, tpu.core_type = #tpu.core_type<tc>, window_params = [{transform_indices = @transform_0, window_bounds = array<i64: 8, 32>}, {pipeline_mode = #tpu.pipeline_mode<synchronous>, transform_indices = @transform_1, window_bounds = array<i64: 32, 128>}, {pipeline_mode = #tpu.pipeline_mode<synchronous>, transform_indices = @transform_2, window_bounds = array<i64: 1, 128>}, {transform_indices = @transform_3, window_bounds = array<i64: 8, 128>}]} {
    %c0 = arith.constant 0 : index
    %c0_0 = arith.constant 0 : index
    %0 = vector.load %arg1[%c0, %c0_0] : memref<8x32xf32, #tpu.memory_space<vmem>>, vector<8x32xf32>
    %cst = arith.constant 0.000000e+00 : f32
    %1 = vector.broadcast %cst : f32 to vector<8x32xf32>
    %2 = arith.maximumf %0, %1 : vector<8x32xf32>
    %c0_1 = arith.constant 0 : index
    %c0_2 = arith.constant 0 : index
    %3 = vector.load %arg2[%c0_1, %c0_2] : memref<32x128xf32, #tpu.memory_space<vmem>>, vector<32x128xf32>
    %cst_3 = arith.constant dense<0.000000e+00> : vector<8x128xf32>
    %4 = tpu.matmul %2, %3, %cst_3 {dimension_numbers = #tpu.dot_dimension_numbers<[1], [0], [0], [1], [0, 0, 1, 1], [], []>} : vector<8x32xf32>, vector<32x128xf32>, vector<8x128xf32> -> vector<8x128xf32>
    %c0_4 = arith.constant 0 : index
    %c0_5 = arith.constant 0 : index
    %5 = vector.load %arg3[%c0_4, %c0_5] : memref<1x128xf32, #tpu.memory_space<vmem>>, vector<1x128xf32>
    %6 = vector.broadcast %5 : vector<1x128xf32> to vector<8x128xf32>
    %7 = arith.addf %4, %6 : vector<8x128xf32>
    %c0_6 = arith.constant 0 : index
    %c0_7 = arith.constant 0 : index
    %8 = vector.load %arg4[%c0_6, %c0_7] : memref<8x128xf32, #tpu.memory_space<vmem>>, vector<8x128xf32>
    tpu.vector_store %arg4[%c0_6, %c0_7], %7 {strides = array<i32>} : memref<8x128xf32, #tpu.memory_space<vmem>>, vector<8x128xf32>,
    return
  }
  func.func @transform_0(%arg0: i32) -> (i32, i32) {
    %c0_i32 = arith.constant 0 : i32
    %c0_i32_0 = arith.constant 0 : i32
    return %arg0, %c0_i32 : i32, i32
  }
  func.func @transform_1(%arg0: i32) -> (i32, i32) {
    %c0_i32 = arith.constant 0 : i32
    %c0_i32_0 = arith.constant 0 : i32
    %c0_i32_1 = arith.constant 0 : i32
    return %c0_i32, %c0_i32_0 : i32, i32
  }
  func.func @transform_2(%arg0: i32) -> (i32, i32) {
    %c0_i32 = arith.constant 0 : i32
    %c0_i32_0 = arith.constant 0 : i32
    %c0_i32_1 = arith.constant 0 : i32
    return %c0_i32, %c0_i32_0 : i32, i32
  }
  func.func @transform_3(%arg0: i32) -> (i32, i32) {
    %c0_i32 = arith.constant 0 : i32
    %c0_i32_0 = arith.constant 0 : i32
    return %arg0, %c0_i32 : i32, i32
  }
}

</mosaic_0001>

<llo_original>
// kernel: tpu_custom_call.1
$region0: #{tpu_custom_call.1}
  #allocation0 [shape = 'u32[]', space=smem, size = 0x4, offset = 0x4, fixed_abs, tag = 'smem constant byte address 0x4 - core index']
  #allocation1 [shape = 'u32[72,128]{1,0:T(1,128)}', space=vmem, size = 0x9000, scoped, tag = 'internal scratch']
  %s0 = inlined_call_operand.hbm [shape: f32[8,32], index: 0, kind: input, shape index: {}]
  %s1 = inlined_call_operand.hbm [shape: f32[32,128], index: 1, kind: input, shape index: {}]
  %s2 = inlined_call_operand.vmem [shape: f32[1,128], index: 2, kind: input, shape index: {}]
  %s3 = inlined_call_operand.hbm [shape: f32[8,128], index: 3, kind: output, shape index: {}]
  %s4 = sld [smem:[#allocation0]]
  $region30: #{tpu_custom_call.1} parent=0
    _
  %s6 = ssub.s32 1, %s4
  %s7 = scalar_select 0, %s6, %s4
  $region1: #{tpu_custom_call.1} parent=0
    #allocation2 [shape = 'u8[4096]{0}', space=vmem, size = 0x1000, scoped, tag = 'input window, operand 0, single buffered']
    #allocation3 [shape = 's32[1]{0}', space=sflag, size = 0x4, scoped, tag = 'scoped memory for tpu_custom_call.1']
    #allocation4 [shape = 's32[1]{0}', space=sflag, size = 0x4, scoped, tag = 'scoped memory for tpu_custom_call.1']
    #allocation5 [shape = 'u8[16384]{0}', space=vmem, size = 0x4000, scoped, tag = 'input window, operand 1, single buffered']
    #allocation6 [shape = 's32[1]{0}', space=sflag, size = 0x4, scoped, tag = 'scoped memory for tpu_custom_call.1']
    #allocation7 [shape = 'u8[4096]{0}', space=vmem, size = 0x1000, scoped, tag = 'output window, operand 0, single buffered']
    %8 = vsyncpa [#allocation3], 0
    %9 = vsyncpa [#allocation6], 0
    %10 = vsyncpa [#allocation4], 0
    // Predicated region
    $region2: #{tpu_custom_call.1} parent=1 // pred_check
      _
    $region3: #{tpu_custom_call.1} parent=1 // pred_check_branch
      %12 = sbr.rel (0) target = $region5
    $region4: #{tpu_custom_call.1} parent=1 // pred_region
      %14 = vsyncadd [#allocation3], 0
      %s16 = sshll.u32 %s0, 4
      %s17 = int_to_ptr.hbm [resolvable:$true] %s16
      %s18 = sshll.u32 [#allocation2], 4
      %s19 = int_to_ptr.vmem [resolvable:$true] %s18
      %21 = dma.hbm_to_vmem [thread:$0]  %s17, 128, %s19, [#allocation3]
    $region5: #{tpu_custom_call.1} parent=1 // pred_fallthru
      _
    // Predicated region
    $region6: #{tpu_custom_call.1} parent=1 // pred_check
      _
    $region7: #{tpu_custom_call.1} parent=1 // pred_check_branch
      %23 = sbr.rel (0) target = $region9
    $region8: #{tpu_custom_call.1} parent=1 // pred_region
      %25 = vsyncadd [#allocation6], 0
      %s26 = sshll.u32 %s1, 4
      %s27 = int_to_ptr.hbm [resolvable:$true] %s26
      %s28 = sshll.u32 [#allocation5], 4
      %s29 = int_to_ptr.vmem [resolvable:$true] %s28
      %34 = dma.hbm_to_vmem [thread:$0]  %s27, 512, %s29, [#allocation6], 128, 128, 8
    $region9: #{tpu_custom_call.1} parent=1 // pred_fallthru
      _
    // Predicated region
    $region10: #{tpu_custom_call.1} parent=1 // pred_check
      _
    $region11: #{tpu_custom_call.1} parent=1 // pred_check_branch
      %36 = sbr.rel (0) target = $region13
    $region12: #{tpu_custom_call.1} parent=1 // pred_region
      _
    $region13: #{tpu_custom_call.1} parent=1 // pred_fallthru
      _
    // Predicated region
    $region14: #{tpu_custom_call.1} parent=1 // pred_check
      _
    $region15: #{tpu_custom_call.1} parent=1 // pred_check_branch
      %38 = sbr.rel (0) target = $region17
    $region16: #{tpu_custom_call.1} parent=1 // pred_region
      %40 = dma.done [#allocation3], 128
    $region17: #{tpu_custom_call.1} parent=1 // pred_fallthru
      _
    // Predicated region
    $region18: #{tpu_custom_call.1} parent=1 // pred_check
      _
    $region19: #{tpu_custom_call.1} parent=1 // pred_check_branch
      %42 = sbr.rel (0) target = $region21
    $region20: #{tpu_custom_call.1} parent=1 // pred_region
      %44 = dma.done [#allocation6], 512
    $region21: #{tpu_custom_call.1} parent=1 // pred_fallthru
      _
    %v45 = vld [vmem:[#allocation2] sm:$0xff]
    %v46 = vmax.f32 %v45, 0.0
    %v47 = vld [vmem:[#allocation5] sm:$0xff]
    %v48 = vld [vmem:[#allocation5 + $0x8] sm:$0xff]
    %v49 = vld [vmem:[#allocation5 + $0x10] sm:$0xff]
    %v50 = vld [vmem:[#allocation5 + $0x18] sm:$0xff]
    %v51 = vld [vmem:[%s2] sm:$0x1]
    %v53 = vperm.slane %v51, 0
    %vm55 = vcmask 261120
    %v57 = vsel %vm55, %v46, 0
    %59 = vmatpush.msra.mxu0 0.0
    %60 = vmatpush.msra.mxu0 0.0
    %61 = vmatpush.msra.mxu0 0.0
    %62 = vmatpush.msra.mxu0 0.0
    %63 = vmatpush.msra.mxu0 0.0
    %64 = vmatpush.msra.mxu0 0.0
    %65 = vmatpush.msra.mxu0 0.0
    %66 = vmatpush.msra.mxu0 0.0
    %67 = vmatpush.msra.mxu0 0.0
    %68 = vmatpush.msra.mxu0 0.0
    %69 = vmatpush.msra.mxu0 0.0
    %70 = vmatpush.msra.mxu0 0.0
    %71 = vmatpush.msra.mxu0 %v50
    %72 = vmatpush.msra.mxu0 %v49
    %73 = vmatpush.msra.mxu0 %v48
    %74 = vmatpush.msra.mxu0 %v47
    %75 = vmatmul.f32.gmra.mxu0 %v57
    %v76 = vpop.f32.mrf.mxu0
    %v77 = vadd.f32 %v53, %v76
    %78 = vdwg.mxu0
    %79 = vst [vmem:[#allocation7] sm:$0xff] %v77
    // Predicated region
    $region22: #{tpu_custom_call.1} parent=1 // pred_check
      _
    $region23: #{tpu_custom_call.1} parent=1 // pred_check_branch
      %81 = sbr.rel (0) target = $region25
    $region24: #{tpu_custom_call.1} parent=1 // pred_region
      %83 = vsyncadd [#allocation4], 0
      %s85 = sshll.u32 [#allocation7], 4
      %s86 = int_to_ptr.vmem [resolvable:$true] %s85
      %s87 = sshll.u32 %s3, 4
      %s88 = int_to_ptr.hbm [resolvable:$true] %s87
      %90 = dma.vmem_to_hbm [thread:$0]  %s86, 128, %s88, [#allocation4]
    $region25: #{tpu_custom_call.1} parent=1 // pred_fallthru
      _
    // Predicated region
    $region26: #{tpu_custom_call.1} parent=1 // pred_check
      _
    $region27: #{tpu_custom_call.1} parent=1 // pred_check_branch
      %92 = sbr.rel (0) target = $region29
    $region28: #{tpu_custom_call.1} parent=1 // pred_region
      %94 = dma.done [#allocation4], 128
    $region29: #{tpu_custom_call.1} parent=1 // pred_fallthru
      _
    %95 = vsyncpa [#allocation3], 1
    %96 = vsyncpa [#allocation6], 1
    %97 = vsyncpa [#allocation4], 1

</llo_original>
